<compile_context>
chip_gen: v7x
topology: tpu7x:2x2x1
jax: 0.10.0
libtpu: 0.0.40
codegen_flags: <defaults>
</compile_context>

<pallas_src>
import jax
import jax.numpy as jnp
import numpy as np
from jax.experimental import pallas as pl
from jax.experimental.pallas import tpu as pltpu

ABLATION_VALUE = 100000.0


def ablation_conv_kernel(idx_ref, patches_ref, w_ref, b_ref, out_ref):
    """Conv (im2col matmul, flattened-NCHW layout) + per-batch ablation.

    idx_ref:     (N,)             int32, SMEM  - per-batch channel to ablate
    patches_ref: (N, Cin*9, H*W)  f32,   VMEM  - im2col patches (HW on lanes)
    w_ref:       (Cout, Cin*9)    f32,   VMEM
    b_ref:       (Cout, 1)        f32,   VMEM
    out_ref:     (N, Cout, H*W)   f32,   VMEM  - flattened NCHW output
    """
    N, _, HW = patches_ref.shape

    # --- conv hot path: MXU matmul per batch image, track global min on the fly
    m = None
    for n in range(N):  # N is small & static
        o = jnp.dot(w_ref[...], patches_ref[n],
                    preferred_element_type=jnp.float32) + b_ref[...]
        out_ref[n] = o
        mn = jnp.min(o)
        m = mn if m is None else jnp.minimum(m, mn)

    # --- ablation: exact scalar recurrence instead of re-reducing the buffer.
    # At step i the reference reads min m_i and writes v_i = (m_i==0 ? 0 :
    # m_i - 1e5); since v_i becomes the new global min (or min stays 0), the
    # next step's min is exactly v_i.
    for i in range(N):
        val = jnp.where(m == 0.0, jnp.float32(0.0), m - ABLATION_VALUE)
        ch = idx_ref[i]
        out_ref[i, pl.ds(ch, 1), :] = jnp.full((1, HW), val, jnp.float32)
        m = val


@jax.jit
def ablation_layer(x, weight, bias, indices):
    """x: (N, Cin, H, W) f32 (NCHW). weight: (Cout, Cin, 3, 3). bias: (Cout,).
    indices: (N,) int32. Returns (N, Cout, H, W) f32 (NCHW)."""
    N, Cin, H, W = x.shape
    Cout = weight.shape[0]

    # im2col glue (padding=1, stride=1, 3x3) -- transpose-free: pure reshapes.
    xp = jnp.pad(x, ((0, 0), (0, 0), (1, 1), (1, 1)))
    cols = []
    for kh in range(3):
        for kw in range(3):
            cols.append(xp[:, :, kh:kh + H, kw:kw + W])   # (N, Cin, H, W)
    patches = jnp.stack(cols, axis=2)                       # (N, Cin, 9, H, W)
    patches = patches.reshape(N, Cin * 9, H * W)            # pure reshape

    w_mat = weight.reshape(Cout, Cin * 9)                   # (Cout, Cin*9)
    b_mat = bias.reshape(Cout, 1)

    out = pl.pallas_call(
        ablation_conv_kernel,
        out_shape=jax.ShapeDtypeStruct((N, Cout, H * W), jnp.float32),
        in_specs=[
            pl.BlockSpec(memory_space=pltpu.MemorySpace.SMEM),   # indices
            pl.BlockSpec(memory_space=pltpu.MemorySpace.VMEM),   # patches
            pl.BlockSpec(memory_space=pltpu.MemorySpace.VMEM),   # weight mat
            pl.BlockSpec(memory_space=pltpu.MemorySpace.VMEM),   # bias
        ],
        out_specs=pl.BlockSpec(memory_space=pltpu.MemorySpace.VMEM),
    )(indices, patches, w_mat, b_mat)

    # flattened NCHW -> NCHW (pure reshape, no transpose)
    return out.reshape(N, Cout, H, W)


def reference(x, weight, bias, indices):
    """Pure JAX/numpy reference reproducing the PyTorch module."""
    out = jax.lax.conv_general_dilated(
        x, weight, window_strides=(1, 1), padding=((1, 1), (1, 1)),
        dimension_numbers=('NCHW', 'OIHW', 'NCHW'))
    out = np.array(out + bias.reshape(1, -1, 1, 1))
    idx = np.array(indices)
    for i in range(out.shape[0]):
        m = out.min()
        if m == 0:
            out[i, idx[i], :] = 0.0
        else:
            out[i, idx[i], :] = m - ABLATION_VALUE
    return out


if __name__ == "__main__":
    key = jax.random.PRNGKey(0)
    kx, kw, kb, ki = jax.random.split(key, 4)

    N, Cin, H, W, Cout = 2, 4, 16, 16, 8
    x = jax.random.normal(kx, (N, Cin, H, W), jnp.float32)
    weight = 0.1 * jax.random.normal(kw, (Cout, Cin, 3, 3), jnp.float32)
    bias = 0.1 * jax.random.normal(kb, (Cout,), jnp.float32)
    indices = jax.random.randint(ki, (N,), 0, Cout, jnp.int32)

    out = ablation_layer(x, weight, bias, indices)
    out = jax.block_until_ready(out)

    ref = reference(x, weight, bias, indices)
    np.testing.assert_allclose(np.array(out), ref, rtol=1e-3, atol=1e-3)

    print("KERNEL_OK")
</pallas_src>

<mosaic_0001>
module attributes {stable_mosaic.version = 11 : i64} {
  func.func @ablation_conv_kernel(%arg0: memref<2xi32, #tpu.memory_space<smem>>, %arg1: memref<2x36x256xf32, #tpu.memory_space<vmem>>, %arg2: memref<8x36xf32, #tpu.memory_space<vmem>>, %arg3: memref<8x1xf32, #tpu.memory_space<vmem>>, %arg4: memref<2x8x256xf32, #tpu.memory_space<vmem>>) attributes {dimension_semantics = [], scalar_prefetch = 0 : i64, scratch_operands = 0 : i64, tpu.core_type = #tpu.core_type<tc>} {
    %c0 = arith.constant 0 : index
    %c0_0 = arith.constant 0 : index
    %0 = vector.load %arg2[%c0, %c0_0] : memref<8x36xf32, #tpu.memory_space<vmem>>, vector<8x36xf32>
    %c0_1 = arith.constant 0 : index
    %c0_2 = arith.constant 0 : index
    %c0_3 = arith.constant 0 : index
    %1 = vector.load %arg1[%c0_1, %c0_2, %c0_3] : memref<2x36x256xf32, #tpu.memory_space<vmem>>, vector<1x36x256xf32>
    %2 = vector.shape_cast %1 : vector<1x36x256xf32> to vector<36x256xf32>
    %cst = arith.constant dense<0.000000e+00> : vector<8x256xf32>
    %3 = tpu.matmul %0, %2, %cst {dimension_numbers = #tpu.dot_dimension_numbers<[1], [0], [0], [1], [0, 0, 1, 1], [], []>} : vector<8x36xf32>, vector<36x256xf32>, vector<8x256xf32> -> vector<8x256xf32>
    %c0_4 = arith.constant 0 : index
    %c0_5 = arith.constant 0 : index
    %4 = vector.load %arg3[%c0_4, %c0_5] : memref<8x1xf32, #tpu.memory_space<vmem>>, vector<8x1xf32>
    %5 = vector.broadcast %4 : vector<8x1xf32> to vector<8x256xf32>
    %6 = arith.addf %3, %5 : vector<8x256xf32>
    %c0_6 = arith.constant 0 : index
    %c0_7 = arith.constant 0 : index
    %c0_8 = arith.constant 0 : index
    %7 = vector.load %arg4[%c0_6, %c0_7, %c0_8] : memref<2x8x256xf32, #tpu.memory_space<vmem>>, vector<1x8x256xf32>
    %8 = vector.shape_cast %7 : vector<1x8x256xf32> to vector<8x256xf32>
    %9 = vector.shape_cast %6 : vector<8x256xf32> to vector<1x8x256xf32>
    tpu.vector_store %arg4[%c0_6, %c0_7, %c0_8], %9 {strides = array<i32>} : memref<2x8x256xf32, #tpu.memory_space<vmem>>, vector<1x8x256xf32>,
    %10 = vector.shape_cast %6 : vector<8x256xf32> to vector<1x8x256xf32>
    %cst_9 = arith.constant dense<0x7F800000> : vector<1xf32>
    %11 = vector.multi_reduction <minimumf>, %10, %cst_9 [1, 2] : vector<1x8x256xf32> to vector<1xf32>
    %12 = vector.shape_cast %11 : vector<1xf32> to vector<1x1x1xf32>
    %13 = vector.extract %12[0, 0, 0] : f32 from vector<1x1x1xf32>
    %c0_10 = arith.constant 0 : index
    %c0_11 = arith.constant 0 : index
    %14 = vector.load %arg2[%c0_10, %c0_11] : memref<8x36xf32, #tpu.memory_space<vmem>>, vector<8x36xf32>
    %c1 = arith.constant 1 : index
    %c0_12 = arith.constant 0 : index
    %c0_13 = arith.constant 0 : index
    %15 = vector.load %arg1[%c1, %c0_12, %c0_13] : memref<2x36x256xf32, #tpu.memory_space<vmem>>, vector<1x36x256xf32>
    %16 = vector.shape_cast %15 : vector<1x36x256xf32> to vector<36x256xf32>
    %cst_14 = arith.constant dense<0.000000e+00> : vector<8x256xf32>
    %17 = tpu.matmul %14, %16, %cst_14 {dimension_numbers = #tpu.dot_dimension_numbers<[1], [0], [0], [1], [0, 0, 1, 1], [], []>} : vector<8x36xf32>, vector<36x256xf32>, vector<8x256xf32> -> vector<8x256xf32>
    %c0_15 = arith.constant 0 : index
    %c0_16 = arith.constant 0 : index
    %18 = vector.load %arg3[%c0_15, %c0_16] : memref<8x1xf32, #tpu.memory_space<vmem>>, vector<8x1xf32>
    %19 = vector.broadcast %18 : vector<8x1xf32> to vector<8x256xf32>
    %20 = arith.addf %17, %19 : vector<8x256xf32>
    %c1_17 = arith.constant 1 : index
    %c0_18 = arith.constant 0 : index
    %c0_19 = arith.constant 0 : index
    %21 = vector.load %arg4[%c1_17, %c0_18, %c0_19] : memref<2x8x256xf32, #tpu.memory_space<vmem>>, vector<1x8x256xf32>
    %22 = vector.shape_cast %21 : vector<1x8x256xf32> to vector<8x256xf32>
    %23 = vector.shape_cast %20 : vector<8x256xf32> to vector<1x8x256xf32>
    tpu.vector_store %arg4[%c1_17, %c0_18, %c0_19], %23 {strides = array<i32>} : memref<2x8x256xf32, #tpu.memory_space<vmem>>, vector<1x8x256xf32>,
    %24 = vector.shape_cast %20 : vector<8x256xf32> to vector<1x8x256xf32>
    %cst_20 = arith.constant dense<0x7F800000> : vector<1xf32>
    %25 = vector.multi_reduction <minimumf>, %24, %cst_20 [1, 2] : vector<1x8x256xf32> to vector<1xf32>
    %26 = vector.shape_cast %25 : vector<1xf32> to vector<1x1x1xf32>
    %27 = vector.extract %26[0, 0, 0] : f32 from vector<1x1x1xf32>
    %28 = arith.minimumf %13, %27 : f32
    %cst_21 = arith.constant 0.000000e+00 : f32
    %29 = arith.cmpf oeq, %28, %cst_21 : f32
    %cst_22 = arith.constant 1.000000e+05 : f32
    %30 = arith.subf %28, %cst_22 : f32
    %cst_23 = arith.constant 0.000000e+00 : f32
    %31 = arith.select %29, %cst_23, %30 : f32
    %c0_24 = arith.constant 0 : index
    %32 = memref.load %arg0[%c0_24] : memref<2xi32, #tpu.memory_space<smem>>
    %33 = vector.broadcast %31 : f32 to vector<1x256xf32>
    %c0_25 = arith.constant 0 : index
    %34 = arith.index_cast %32 : i32 to index
    %c0_26 = arith.constant 0 : index
    %35 = vector.load %arg4[%c0_25, %34, %c0_26] : memref<2x8x256xf32, #tpu.memory_space<vmem>>, vector<1x1x256xf32>
    %36 = vector.shape_cast %35 : vector<1x1x256xf32> to vector<1x256xf32>
    %37 = vector.shape_cast %33 : vector<1x256xf32> to vector<1x1x256xf32>
    tpu.vector_store %arg4[%c0_25, %34, %c0_26], %37 {strides = array<i32>} : memref<2x8x256xf32, #tpu.memory_space<vmem>>, vector<1x1x256xf32>,
    %cst_27 = arith.constant 0.000000e+00 : f32
    %38 = arith.cmpf oeq, %31, %cst_27 : f32
    %cst_28 = arith.constant 1.000000e+05 : f32
    %39 = arith.subf %31, %cst_28 : f32
    %cst_29 = arith.constant 0.000000e+00 : f32
    %40 = arith.select %38, %cst_29, %39 : f32
    %c1_30 = arith.constant 1 : index
    %41 = memref.load %arg0[%c1_30] : memref<2xi32, #tpu.memory_space<smem>>
    %42 = vector.broadcast %40 : f32 to vector<1x256xf32>
    %c1_31 = arith.constant 1 : index
    %43 = arith.index_cast %41 : i32 to index
    %c0_32 = arith.constant 0 : index
    %44 = vector.load %arg4[%c1_31, %43, %c0_32] : memref<2x8x256xf32, #tpu.memory_space<vmem>>, vector<1x1x256xf32>
    %45 = vector.shape_cast %44 : vector<1x1x256xf32> to vector<1x256xf32>
    %46 = vector.shape_cast %42 : vector<1x256xf32> to vector<1x1x256xf32>
    tpu.vector_store %arg4[%c1_31, %43, %c0_32], %46 {strides = array<i32>} : memref<2x8x256xf32, #tpu.memory_space<vmem>>, vector<1x1x256xf32>,
    return
  }
}

</mosaic_0001>

<llo_original>
// kernel: ablation_layer.1
$region0: #{ablation_layer.1}
  #allocation0 [shape = 'u32[]', space=smem, size = 0x4, offset = 0x4, fixed_abs, tag = 'smem constant byte address 0x4 - core index']
  #allocation1 [shape = 'u32[144,128]{1,0:T(1,128)}', space=vmem, size = 0x12000, scoped, tag = 'internal scratch']
  %s0 = inlined_call_operand.vmem [shape: s32[2], index: 0, kind: input, shape index: {}]
  %s1 = inlined_call_operand.vmem [shape: f32[2,36,256], index: 1, kind: input, shape index: {}]
  %s2 = inlined_call_operand.vmem [shape: f32[8,36], index: 2, kind: input, shape index: {}]
  %s3 = inlined_call_operand.vmem [shape: f32[8,1], index: 3, kind: input, shape index: {}]
  %s4 = inlined_call_operand.vmem [shape: f32[2,8,256], index: 4, kind: output, shape index: {}]
  %s5 = sld [smem:[#allocation0]]
  $region30: #{ablation_layer.1} parent=0
    _
  %s7 = ssub.s32 1, %s5
  %s8 = scalar_select 0, %s7, %s5
  $region1: #{ablation_layer.1} parent=0
    #allocation2 [shape = 'u8[512]{0}', space=smem, size = 0x200, scoped, tag = 'input window, operand 0, single buffered']
    #allocation3 [shape = 's32[1]{0}', space=sflag, size = 0x4, scoped, tag = 'scoped memory for ablation_layer.1']
    %9 = vsyncpa [#allocation3], 0
    // Predicated region
    $region2: #{ablation_layer.1} parent=1 // pred_check
      _
    $region3: #{ablation_layer.1} parent=1 // pred_check_branch
      %11 = sbr.rel (0) target = $region5
    $region4: #{ablation_layer.1} parent=1 // pred_region
      %s13 = ssub.s32 16, 16
      %14 = vsyncadd [#allocation3], %s13
      %s16 = sshll.u32 %s0, 4
      %s17 = int_to_ptr.vmem [resolvable:$true] %s16
      %19 = dma.vmem_to_smem %s17, 16, [#allocation2], [#allocation3]
    $region5: #{ablation_layer.1} parent=1 // pred_fallthru
      _
    // Predicated region
    $region6: #{ablation_layer.1} parent=1 // pred_check
      _
    $region7: #{ablation_layer.1} parent=1 // pred_check_branch
      %21 = sbr.rel (0) target = $region9
    $region8: #{ablation_layer.1} parent=1 // pred_region
      _
    $region9: #{ablation_layer.1} parent=1 // pred_fallthru
      _
    // Predicated region
    $region10: #{ablation_layer.1} parent=1 // pred_check
      _
    $region11: #{ablation_layer.1} parent=1 // pred_check_branch
      %23 = sbr.rel (0) target = $region13
    $region12: #{ablation_layer.1} parent=1 // pred_region
      _
    $region13: #{ablation_layer.1} parent=1 // pred_fallthru
      _
    // Predicated region
    $region14: #{ablation_layer.1} parent=1 // pred_check
      _
    $region15: #{ablation_layer.1} parent=1 // pred_check_branch
      %25 = sbr.rel (0) target = $region17
    $region16: #{ablation_layer.1} parent=1 // pred_region
      _
    $region17: #{ablation_layer.1} parent=1 // pred_fallthru
      _
    // Predicated region
    $region18: #{ablation_layer.1} parent=1 // pred_check
      _
    $region19: #{ablation_layer.1} parent=1 // pred_check_branch
      %27 = sbr.rel (0) target = $region21
    $region20: #{ablation_layer.1} parent=1 // pred_region
      %28 = dma.done [#allocation3], 16
    $region21: #{ablation_layer.1} parent=1 // pred_fallthru
      _
    %29 = sfence
    %v30 = vld [vmem:[%s2] sm:$0xff]
    %v31 = vld [vmem:[%s1] sm:$0xff]
    %v32 = vld [vmem:[%s1 + $0x8] sm:$0xff]
    %v33 = vld [vmem:[%s1 + $0x10] sm:$0xff]
    %v34 = vld [vmem:[%s1 + $0x18] sm:$0xff]
    %v35 = vld [vmem:[%s1 + $0x20] sm:$0xff]
    %v36 = vld [vmem:[%s1 + $0x28] sm:$0xff]
    %v37 = vld [vmem:[%s1 + $0x30] sm:$0xff]
    %v38 = vld [vmem:[%s1 + $0x38] sm:$0xff]
    %v39 = vld [vmem:[%s1 + $0x40] sm:$0xf]
    %v40 = vld [vmem:[%s1 + $0x48] sm:$0xf]
    %v41 = vld [vmem:[%s3] sm:$0xff]
    %43 = vset.pattern.permute.xlu0 0
    %44 = vperm.xlu0 %43, %v41
    %v45 = vpop.permute.xlu0 %44
    %vm47 = vcmask 293888
    %v49 = vsel %vm47, %v30, 0
    %vm51 = vcmask 1043456
    %v53 = vsel %vm51, %v39, 0
    %v56 = vsel %vm51, %v40, 0
    %58 = vmatprep.subr.mxu0 %v32
    %59 = vmatpush1.msra.mxu0 %v31
    %60 = vmatprep.subr.mxu0 %v34
    %61 = vmatpush1.msra.mxu0 %v33
    %62 = vmatprep.subr.mxu0 %v36
    %63 = vmatpush1.msra.mxu0 %v35
    %64 = vmatprep.subr.mxu0 %v38
    %65 = vmatpush1.msra.mxu0 %v37
    %66 = vmatprep.subr.mxu0 %v56
    %67 = vmatpush1.msra.mxu0 %v53
    %68 = vmatprep.subr.mxu0 0.0
    %69 = vmatpush1.msra.mxu0 0.0
    %70 = vmatprep.subr.mxu0 0.0
    %71 = vmatpush1.msra.mxu0 0.0
    %72 = vmatprep.subr.mxu0 0.0
    %73 = vmatpush1.msra.mxu0 0.0
    %74 = vmatprep.subr.mxu0 0.0
    %75 = vmatpush1.msra.mxu0 0.0
    %76 = vmatprep.subr.mxu0 0.0
    %77 = vmatpush1.msra.mxu0 0.0
    %78 = vmatprep.subr.mxu0 0.0
    %79 = vmatpush1.msra.mxu0 0.0
    %80 = vmatprep.subr.mxu0 0.0
    %81 = vmatpush1.msra.mxu0 0.0
    %82 = vmatprep.subr.mxu0 0.0
    %83 = vmatpush1.msra.mxu0 0.0
    %84 = vmatprep.subr.mxu0 0.0
    %85 = vmatpush1.msra.mxu0 0.0
    %86 = vmatprep.subr.mxu0 0.0
    %87 = vmatpush1.msra.mxu0 0.0
    %88 = vmatprep.subr.mxu0 0.0
    %89 = vmatpush1.msra.mxu0 0.0
    %90 = vmatprep.subr.mxu0 0.0
    %91 = vmatpush1.msra.mxu0 0.0
    %92 = vmatprep.subr.mxu0 0.0
    %93 = vmatpush1.msra.mxu0 0.0
    %94 = vmatprep.subr.mxu0 0.0
    %95 = vmatpush1.msra.mxu0 0.0
    %96 = vmatprep.subr.mxu0 0.0
    %97 = vmatpush1.msra.mxu0 0.0
    %98 = vmatprep.subr.mxu0 0.0
    %99 = vmatpush1.msra.mxu0 0.0
    %100 = vmatprep.subr.mxu0 0.0
    %101 = vmatpush1.msra.mxu0 0.0
    %102 = vmatprep.subr.mxu0 0.0
    %103 = vmatpush1.msra.mxu0 0.0
    %104 = vmatprep.subr.mxu0 0.0
    %105 = vmatpush1.msra.mxu0 0.0
    %106 = vmatprep.subr.mxu0 0.0
    %107 = vmatpush1.msra.mxu0 0.0
    %108 = vmatprep.subr.mxu0 0.0
    %109 = vmatpush1.msra.mxu0 0.0
    %110 = vmatprep.subr.mxu0 0.0
    %111 = vmatpush1.msra.mxu0 0.0
    %112 = vmatprep.subr.mxu0 0.0
    %113 = vmatpush1.msra.mxu0 0.0
    %114 = vmatprep.subr.mxu0 0.0
    %115 = vmatpush1.msra.mxu0 0.0
    %116 = vmatprep.subr.mxu0 0.0
    %117 = vmatpush1.msra.mxu0 0.0
    %118 = vmatprep.subr.mxu0 0.0
    %119 = vmatpush1.msra.mxu0 0.0
    %120 = vmatprep.subr.mxu0 0.0
    %121 = vmatpush1.msra.mxu0 0.0
    %122 = vmatprep.mubr.f32.mxu0 0.0
    %123 = vmatmul.mubr.f32.gmra.mrb[0].mxu0 %v49
    %v124 = vpop.f32.mrb[0].mxu0
    %v125 = vadd.f32 %v45, %v124
    %v126 = vpop.f32.mrb[0].mxu0
    %v127 = vadd.f32 %v45, %v126
    %128 = vdwg.mxu0
    %129 = vst [vmem:[%s4] sm:$0xff] %v125
    %130 = vst [vmem:[%s4 + $0x8] sm:$0xff] %v127
    %v131 = vmin.f32 %v125, %v127
    %132 = vmin.xlane.f32.xlu0 %v131
    %v133 = vpop.xlane.xlu0 %132
    %v134 = vrot.slane %v133, 4
    %v135 = vmin.f32 %v133, %v134
    %v136 = vrot.slane %v135, 2
    %v137 = vmin.f32 %v135, %v136
    %v138 = vrot.slane %v137, 1
    %v139 = vmin.f32 %v137, %v138
    %s140 = vtos %v139
    %v141 = vld [vmem:[%s2] sm:$0xff]
    %s142 = scalar_lea.vmem %s1, 80
    %v143 = vld [vmem:[%s142] sm:$0xff]
    %v144 = vld [vmem:[%s142 + $0x8] sm:$0xff]
    %v145 = vld [vmem:[%s142 + $0x10] sm:$0xff]
    %v146 = vld [vmem:[%s142 + $0x18] sm:$0xff]
    %v147 = vld [vmem:[%s142 + $0x20] sm:$0xff]
    %v148 = vld [vmem:[%s142 + $0x28] sm:$0xff]
    %v149 = vld [vmem:[%s142 + $0x30] sm:$0xff]
    %v150 = vld [vmem:[%s142 + $0x38] sm:$0xff]
    %v151 = vld [vmem:[%s142 + $0x40] sm:$0xf]
    %v152 = vld [vmem:[%s142 + $0x48] sm:$0xf]
    %v153 = vld [vmem:[%s3] sm:$0xff]
    %155 = vset.pattern.permute.xlu0 0
    %156 = vperm.xlu0 %155, %v153
    %v157 = vpop.permute.xlu0 %156
    %v160 = vsel %vm47, %v141, 0
    %v163 = vsel %vm51, %v151, 0
    %v166 = vsel %vm51, %v152, 0
    %168 = vmatprep.subr.mxu0 %v144
    %169 = vmatpush1.msra.mxu0 %v143
    %170 = vmatprep.subr.mxu0 %v146
    %171 = vmatpush1.msra.mxu0 %v145
    %172 = vmatprep.subr.mxu0 %v148
    %173 = vmatpush1.msra.mxu0 %v147
    %174 = vmatprep.subr.mxu0 %v150
    %175 = vmatpush1.msra.mxu0 %v149
    %176 = vmatprep.subr.mxu0 %v166
    %177 = vmatpush1.msra.mxu0 %v163
    %178 = vmatprep.subr.mxu0 0.0
    %179 = vmatpush1.msra.mxu0 0.0
    %180 = vmatprep.subr.mxu0 0.0
    %181 = vmatpush1.msra.mxu0 0.0
    %182 = vmatprep.subr.mxu0 0.0
    %183 = vmatpush1.msra.mxu0 0.0
    %184 = vmatprep.subr.mxu0 0.0
    %185 = vmatpush1.msra.mxu0 0.0
    %186 = vmatprep.subr.mxu0 0.0
    %187 = vmatpush1.msra.mxu0 0.0
    %188 = vmatprep.subr.mxu0 0.0
    %189 = vmatpush1.msra.mxu0 0.0
    %190 = vmatprep.subr.mxu0 0.0
    %191 = vmatpush1.msra.mxu0 0.0
    %192 = vmatprep.subr.mxu0 0.0
    %193 = vmatpush1.msra.mxu0 0.0
    %194 = vmatprep.subr.mxu0 0.0
    %195 = vmatpush1.msra.mxu0 0.0
    %196 = vmatprep.subr.mxu0 0.0
    %197 = vmatpush1.msra.mxu0 0.0
    %198 = vmatprep.subr.mxu0 0.0
    %199 = vmatpush1.msra.mxu0 0.0
    %200 = vmatprep.subr.mxu0 0.0
    %201 = vmatpush1.msra.mxu0 0.0
    %202 = vmatprep.subr.mxu0 0.0
    %203 = vmatpush1.msra.mxu0 0.0
    %204 = vmatprep.subr.mxu0 0.0
    %205 = vmatpush1.msra.mxu0 0.0
    %206 = vmatprep.subr.mxu0 0.0
    %207 = vmatpush1.msra.mxu0 0.0
    %208 = vmatprep.subr.mxu0 0.0
    %209 = vmatpush1.msra.mxu0 0.0
    %210 = vmatprep.subr.mxu0 0.0
    %211 = vmatpush1.msra.mxu0 0.0
    %212 = vmatprep.subr.mxu0 0.0
    %213 = vmatpush1.msra.mxu0 0.0
    %214 = vmatprep.subr.mxu0 0.0
    %215 = vmatpush1.msra.mxu0 0.0
    %216 = vmatprep.subr.mxu0 0.0
    %217 = vmatpush1.msra.mxu0 0.0
    %218 = vmatprep.subr.mxu0 0.0
    %219 = vmatpush1.msra.mxu0 0.0
    %220 = vmatprep.subr.mxu0 0.0
    %221 = vmatpush1.msra.mxu0 0.0
    %222 = vmatprep.subr.mxu0 0.0
    %223 = vmatpush1.msra.mxu0 0.0
    %224 = vmatprep.subr.mxu0 0.0
    %225 = vmatpush1.msra.mxu0 0.0
    %226 = vmatprep.subr.mxu0 0.0
    %227 = vmatpush1.msra.mxu0 0.0
    %228 = vmatprep.subr.mxu0 0.0
    %229 = vmatpush1.msra.mxu0 0.0
    %230 = vmatprep.subr.mxu0 0.0
    %231 = vmatpush1.msra.mxu0 0.0
    %232 = vmatprep.mubr.f32.mxu0 0.0
    %233 = vmatmul.mubr.f32.gmra.mrb[0].mxu0 %v160
    %v234 = vpop.f32.mrb[0].mxu0
    %v235 = vadd.f32 %v157, %v234
    %v236 = vpop.f32.mrb[0].mxu0
    %v237 = vadd.f32 %v157, %v236
    %238 = vdwg.mxu0
    %s239 = scalar_lea.vmem %s4, 16
    %240 = vst [vmem:[%s239] sm:$0xff] %v235
    %241 = vst [vmem:[%s239 + $0x8] sm:$0xff] %v237
    %v242 = vmin.f32 %v235, %v237
    %243 = vmin.xlane.f32.xlu0 %v242
    %v244 = vpop.xlane.xlu0 %243
    %v245 = vrot.slane %v244, 4
    %v246 = vmin.f32 %v244, %v245
    %v247 = vrot.slane %v246, 2
    %v248 = vmin.f32 %v246, %v247
    %v249 = vrot.slane %v248, 1
    %v250 = vmin.f32 %v248, %v249
    %s251 = vtos %v250
    %s252 = smin.f32 %s140, %s251
    %p253 = scmp.eq.f32.partialorder %s252, 0.0
    %s254 = ssub.f32 %s252, 100000.0
    %s255 = scalar_select %p253, 0.0, %s254
    %s256 = sld [smem:[#allocation2]]
    %v257 = vstv %s255
    %v258 = vlaneseq
    %vm259 = vcmp.ge.s32.totalorder %v258, 0
    %vm260 = vcmp.lt.s32.totalorder %v258, 256
    %vm261 = vmand %vm259, %vm260
    %s262 = sshra.s32 %s256, 3
    %s263 = sand.u32 %s256, 7
    %s264 = sshra.s32 %s256, 3
    %s265 = sand.u32 %s256, 7
    %s266 = smul.u32 %s262, 2
    %s267 = smul.u32 %s266, 8
    %s268 = sadd.s32 %s267, %s265
    %s269 = scalar_lea.vmem %s4, %s268
    %270 = vst.msk [vmem:[%s269] ss:$8 sm:$0x3] %vm261, %v257
    %271 = vst.msk [vmem:[%s269] ss:$8 sm:$0x0] %vm261, %v257
    %p272 = scmp.eq.f32.partialorder %s255, 0.0
    %s273 = ssub.f32 %s255, 100000.0
    %s274 = scalar_select %p272, 0.0, %s273
    %s275 = sld [smem:[#allocation2 + $0x1]]
    %v276 = vstv %s274
    %s277 = sshra.s32 %s275, 3
    %s278 = sand.u32 %s275, 7
    %s279 = sshra.s32 %s275, 3
    %s280 = sand.u32 %s275, 7
    %s281 = smul.u32 %s277, 2
    %s282 = smul.u32 %s281, 8
    %s283 = sadd.s32 %s282, %s280
    %s284 = sadd.s32 16, %s283
    %s285 = scalar_lea.vmem %s4, %s284
    %286 = vst.msk [vmem:[%s285] ss:$8 sm:$0x3] %vm261, %v276
    %287 = vst.msk [vmem:[%s285] ss:$8 sm:$0x0] %vm261, %v276
    // Predicated region
    $region22: #{ablation_layer.1} parent=1 // pred_check
      _
    $region23: #{ablation_layer.1} parent=1 // pred_check_branch
      %289 = sbr.rel (0) target = $region25
    $region24: #{ablation_layer.1} parent=1 // pred_region
      _
    $region25: #{ablation_layer.1} parent=1 // pred_fallthru
      _
    // Predicated region
    $region26: #{ablation_layer.1} parent=1 // pred_check
      _
    $region27: #{ablation_layer.1} parent=1 // pred_check_branch
      %291 = sbr.rel (0) target = $region29
    $region28: #{ablation_layer.1} parent=1 // pred_region
      _
    $region29: #{ablation_layer.1} parent=1 // pred_fallthru
      _
    %292 = vsyncpa [#allocation3], 1

</llo_original>
